<compile_context>
chip_gen: v7x
topology: tpu7x:2x2x1
jax: 0.10.0
libtpu: 0.0.40
codegen_flags: <defaults>
</compile_context>

<pallas_src>
import functools

import jax
import jax.numpy as jnp
from jax.experimental import pallas as pl
from jax.experimental.pallas import tpu as pltpu


def _mlp_kernel(x_ref, w1_ref, b1_ref, w2_ref, b2_ref, w3_ref, b3_ref, o_ref):
    """Feature-major MLP tile: x_ref is (D, TB); output tile is (1, TB)."""
    x = x_ref[...]                       # (D, TB), bf16 (or f32)
    cdt = x.dtype                        # compute dtype for MXU inputs

    # Layer 1: (32, D) @ (D, TB) -> (32, TB), f32 accumulate, f32 bias+ReLU.
    h1 = jnp.dot(w1_ref[...], x, preferred_element_type=jnp.float32) + b1_ref[...]
    h1 = jnp.maximum(h1, 0.0).astype(cdt)

    # Layer 2: (16, 32) @ (32, TB) -> (16, TB).
    h2 = jnp.dot(w2_ref[...], h1, preferred_element_type=jnp.float32) + b2_ref[...]
    h2 = jnp.maximum(h2, 0.0).astype(cdt)

    # Layer 3: (1, 16) @ (16, TB) -> (1, TB), lane-dense; sigmoid on the EUP.
    z = jnp.dot(w3_ref[...], h2, preferred_element_type=jnp.float32) + b3_ref[...]
    o_ref[...] = jax.nn.sigmoid(z).astype(o_ref.dtype)   # unmasked, lane-dense store


def _round_up(n, m):
    return pl.cdiv(n, m) * m


def _vmem_estimate_bytes(tb, d, act_bytes):
    """Rough VMEM footprint: double-buffered streams + resident weights + activations."""
    x_blk = 2 * d * tb * act_bytes                       # streamed input (x2 buffers)
    out_blk = 2 * tb * 4                                  # streamed output (x2 buffers)
    weights = 2 * ((32 * d + 16 * 32 + 16) * act_bytes + (32 + 16 + 1) * 4)
    acts = (32 + 16 + 1) * tb * (4 + act_bytes)           # f32 results + cast copies
    return x_blk + out_blk + weights + acts


@functools.partial(jax.jit, static_argnames=("tile_b", "use_bf16"))
def earthquake_predictor(x, params, *, tile_b=512, use_bf16=True):
    """x: (B, input_dim) float32.  params: PyTorch-layout dict (w: (out,in), b: (out,1)).

    tile_b: batch tile (multiple of 128).  512 is a good default for v5e/v6e;
            raise to 2048-4096 on v7x/v6e for large B (footprint is ~264 B/row).
    """
    B, D = x.shape
    w1, b1, w2, b2, w3, b3 = (params[k] for k in ("w1", "b1", "w2", "b2", "w3", "b3"))

    cdt = jnp.bfloat16 if use_bf16 else jnp.float32
    act_bytes = 2 if use_bf16 else 4

    # Batch tile / padding: lane axis (batch) must be a multiple of 128.
    TB = int(min(tile_b, _round_up(B, 128)))
    Bp = int(_round_up(B, TB))
    G = Bp // TB

    # Feature-major, low-precision x stream (XLA fuses transpose + convert into one pass).
    x_t = jnp.transpose(x).astype(cdt)                    # (D, B)
    if Bp != B:
        x_t = jnp.pad(x_t, ((0, 0), (0, Bp - B)))

    w1c, w2c, w3c = w1.astype(cdt), w2.astype(cdt), w3.astype(cdt)

    const = lambda shape: pl.BlockSpec(shape, lambda i: (0, 0))   # VMEM-resident params

    cost = pl.CostEstimate(
        flops=2 * B * (D * 32 + 32 * 16 + 16 * 1),
        transcendentals=B,                                        # sigmoid
        bytes_accessed=B * D * act_bytes
        + (32 * D + 16 * 32 + 16) * act_bytes
        + (32 + 16 + 1) * 4
        + B * 4,
    )

    out2d = pl.pallas_call(
        _mlp_kernel,
        out_shape=jax.ShapeDtypeStruct((G, TB), jnp.float32),
        grid=(G,),
        in_specs=[
            pl.BlockSpec((D, TB), lambda i: (0, i)),              # x: streamed per tile
            const(w1c.shape), const(b1.shape),
            const(w2c.shape), const(b2.shape),
            const(w3c.shape), const(b3.shape),
        ],
        out_specs=pl.BlockSpec((1, TB), lambda i: (i, 0)),        # lane-dense (1, TB) slab
        compiler_params=pltpu.CompilerParams(
            dimension_semantics=("parallel",),
            vmem_limit_bytes=int(max(4 << 20, 4 * _vmem_estimate_bytes(TB, D, act_bytes))),
        ),
        cost_estimate=cost,
    )(x_t, w1c, b1, w2c, b2, w3c, b3)

    # (G, TB) lane-dense slab -> (B, 1) column (pure layout plumbing, outside the kernel).
    return out2d.reshape(Bp, 1)[:B]


def init_params(key, input_dim):
    """PyTorch-style uniform(-1/sqrt(fan_in), 1/sqrt(fan_in)) init, PyTorch (out, in) layout."""
    dims = [(input_dim, 32), (32, 16), (16, 1)]
    params = {}
    for i, (fan_in, fan_out) in enumerate(dims, start=1):
        key, kw, kb = jax.random.split(key, 3)
        bound = 1.0 / jnp.sqrt(float(fan_in))
        params[f"w{i}"] = jax.random.uniform(
            kw, (fan_out, fan_in), jnp.float32, minval=-bound, maxval=bound)
        # biases kept (out, 1) so they broadcast across the lane (batch) axis in-kernel
        params[f"b{i}"] = jax.random.uniform(
            kb, (fan_out, 1), jnp.float32, minval=-bound, maxval=bound)
    return params


def reference_forward(x, params, use_bf16=True):
    """Pure-JAX reference mirroring the kernel's mixed precision (bf16 in, f32 accumulate)."""
    cdt = jnp.bfloat16 if use_bf16 else jnp.float32
    w1, b1 = params["w1"].astype(cdt), params["b1"]
    w2, b2 = params["w2"].astype(cdt), params["b2"]
    w3, b3 = params["w3"].astype(cdt), params["b3"]
    h1 = jnp.maximum(
        jnp.dot(x.astype(cdt), w1.T, preferred_element_type=jnp.float32) + b1.T, 0.0)
    h2 = jnp.maximum(
        jnp.dot(h1.astype(cdt), w2.T, preferred_element_type=jnp.float32) + b2.T, 0.0)
    z = jnp.dot(h2.astype(cdt), w3.T, preferred_element_type=jnp.float32) + b3.T
    return jax.nn.sigmoid(z)


if __name__ == "__main__":
    key = jax.random.PRNGKey(0)
    key, kx, kp = jax.random.split(key, 3)

    batch, input_dim = 8, 16
    x = jax.random.normal(kx, (batch, input_dim), jnp.float32)
    params = init_params(kp, input_dim)

    out = earthquake_predictor(x, params)
    out = jax.block_until_ready(out)

    ref = reference_forward(x, params)
    assert out.shape == (batch, 1), f"bad shape {out.shape}"
    assert jnp.allclose(out, ref, atol=1e-4, rtol=1e-4), "mismatch vs reference"

    print("KERNEL_OK")
</pallas_src>

<mosaic_0001>
module attributes {stable_mosaic.version = 11 : i64} {
  func.func @_mlp_kernel(%arg0: i32, %arg1: memref<16x128xbf16, #tpu.memory_space<vmem>>, %arg2: memref<32x16xbf16, #tpu.memory_space<vmem>>, %arg3: memref<32x1xf32, #tpu.memory_space<vmem>>, %arg4: memref<16x32xbf16, #tpu.memory_space<vmem>>, %arg5: memref<16x1xf32, #tpu.memory_space<vmem>>, %arg6: memref<1x16xbf16, #tpu.memory_space<vmem>>, %arg7: memref<1x1xf32, #tpu.memory_space<vmem>>, %arg8: memref<1x128xf32, #tpu.memory_space<vmem>>) attributes {dimension_semantics = [#tpu.dimension_semantics<parallel>], iteration_bounds = array<i64: 1>, scalar_prefetch = 0 : i64, scratch_operands = 0 : i64, tpu.core_type = #tpu.core_type<tc>, window_params = [{transform_indices = @transform_0, window_bounds = array<i64: 16, 128>}, {pipeline_mode = #tpu.pipeline_mode<synchronous>, transform_indices = @transform_1, window_bounds = array<i64: 32, 16>}, {pipeline_mode = #tpu.pipeline_mode<synchronous>, transform_indices = @transform_2, window_bounds = array<i64: 32, 1>}, {pipeline_mode = #tpu.pipeline_mode<synchronous>, transform_indices = @transform_3, window_bounds = array<i64: 16, 32>}, {pipeline_mode = #tpu.pipeline_mode<synchronous>, transform_indices = @transform_4, window_bounds = array<i64: 16, 1>}, {pipeline_mode = #tpu.pipeline_mode<synchronous>, transform_indices = @transform_5, window_bounds = array<i64: 1, 16>}, {pipeline_mode = #tpu.pipeline_mode<synchronous>, transform_indices = @transform_6, window_bounds = array<i64: 1, 1>}, {transform_indices = @transform_7, window_bounds = array<i64: 1, 128>}]} {
    %c0 = arith.constant 0 : index
    %c0_0 = arith.constant 0 : index
    %0 = vector.load %arg1[%c0, %c0_0] : memref<16x128xbf16, #tpu.memory_space<vmem>>, vector<16x128xbf16>
    %c0_1 = arith.constant 0 : index
    %c0_2 = arith.constant 0 : index
    %1 = vector.load %arg2[%c0_1, %c0_2] : memref<32x16xbf16, #tpu.memory_space<vmem>>, vector<32x16xbf16>
    %cst = arith.constant dense<0.000000e+00> : vector<32x128xf32>
    %2 = tpu.matmul %1, %0, %cst {dimension_numbers = #tpu.dot_dimension_numbers<[1], [0], [0], [1], [0, 0, 1, 1], [], []>} : vector<32x16xbf16>, vector<16x128xbf16>, vector<32x128xf32> -> vector<32x128xf32>
    %c0_3 = arith.constant 0 : index
    %c0_4 = arith.constant 0 : index
    %3 = vector.load %arg3[%c0_3, %c0_4] : memref<32x1xf32, #tpu.memory_space<vmem>>, vector<32x1xf32>
    %4 = vector.broadcast %3 : vector<32x1xf32> to vector<32x128xf32>
    %5 = arith.addf %2, %4 : vector<32x128xf32>
    %cst_5 = arith.constant 0.000000e+00 : f32
    %6 = vector.broadcast %cst_5 : f32 to vector<32x128xf32>
    %7 = arith.maximumf %5, %6 : vector<32x128xf32>
    %8 = arith.truncf %7 : vector<32x128xf32> to vector<32x128xbf16>
    %c0_6 = arith.constant 0 : index
    %c0_7 = arith.constant 0 : index
    %9 = vector.load %arg4[%c0_6, %c0_7] : memref<16x32xbf16, #tpu.memory_space<vmem>>, vector<16x32xbf16>
    %cst_8 = arith.constant dense<0.000000e+00> : vector<16x128xf32>
    %10 = tpu.matmul %9, %8, %cst_8 {dimension_numbers = #tpu.dot_dimension_numbers<[1], [0], [0], [1], [0, 0, 1, 1], [], []>} : vector<16x32xbf16>, vector<32x128xbf16>, vector<16x128xf32> -> vector<16x128xf32>
    %c0_9 = arith.constant 0 : index
    %c0_10 = arith.constant 0 : index
    %11 = vector.load %arg5[%c0_9, %c0_10] : memref<16x1xf32, #tpu.memory_space<vmem>>, vector<16x1xf32>
    %12 = vector.broadcast %11 : vector<16x1xf32> to vector<16x128xf32>
    %13 = arith.addf %10, %12 : vector<16x128xf32>
    %cst_11 = arith.constant 0.000000e+00 : f32
    %14 = vector.broadcast %cst_11 : f32 to vector<16x128xf32>
    %15 = arith.maximumf %13, %14 : vector<16x128xf32>
    %16 = arith.truncf %15 : vector<16x128xf32> to vector<16x128xbf16>
    %c0_12 = arith.constant 0 : index
    %c0_13 = arith.constant 0 : index
    %17 = vector.load %arg6[%c0_12, %c0_13] : memref<1x16xbf16, #tpu.memory_space<vmem>>, vector<1x16xbf16>
    %cst_14 = arith.constant dense<0.000000e+00> : vector<1x128xf32>
    %18 = tpu.matmul %17, %16, %cst_14 {dimension_numbers = #tpu.dot_dimension_numbers<[1], [0], [0], [1], [0, 0, 1, 1], [], []>} : vector<1x16xbf16>, vector<16x128xbf16>, vector<1x128xf32> -> vector<1x128xf32>
    %c0_15 = arith.constant 0 : index
    %c0_16 = arith.constant 0 : index
    %19 = vector.load %arg7[%c0_15, %c0_16] : memref<1x1xf32, #tpu.memory_space<vmem>>, vector<1x1xf32>
    %20 = vector.broadcast %19 : vector<1x1xf32> to vector<1x128xf32>
    %21 = arith.addf %18, %20 : vector<1x128xf32>
    %22 = arith.negf %21 : vector<1x128xf32>
    %23 = math.exp %22 : vector<1x128xf32>
    %cst_17 = arith.constant 1.000000e+00 : f32
    %24 = vector.broadcast %cst_17 : f32 to vector<1x128xf32>
    %25 = arith.addf %24, %23 : vector<1x128xf32>
    %26 = arith.divf %24, %25 : vector<1x128xf32>
    %c0_18 = arith.constant 0 : index
    %c0_19 = arith.constant 0 : index
    %27 = vector.load %arg8[%c0_18, %c0_19] : memref<1x128xf32, #tpu.memory_space<vmem>>, vector<1x128xf32>
    tpu.vector_store %arg8[%c0_18, %c0_19], %26 {strides = array<i32>} : memref<1x128xf32, #tpu.memory_space<vmem>>, vector<1x128xf32>,
    return
  }
  func.func @transform_0(%arg0: i32) -> (i32, i32) {
    %c0_i32 = arith.constant 0 : i32
    %c0_i32_0 = arith.constant 0 : i32
    return %c0_i32, %arg0 : i32, i32
  }
  func.func @transform_1(%arg0: i32) -> (i32, i32) {
    %c0_i32 = arith.constant 0 : i32
    %c0_i32_0 = arith.constant 0 : i32
    %c0_i32_1 = arith.constant 0 : i32
    return %c0_i32, %c0_i32_0 : i32, i32
  }
  func.func @transform_2(%arg0: i32) -> (i32, i32) {
    %c0_i32 = arith.constant 0 : i32
    %c0_i32_0 = arith.constant 0 : i32
    %c0_i32_1 = arith.constant 0 : i32
    return %c0_i32, %c0_i32_0 : i32, i32
  }
  func.func @transform_3(%arg0: i32) -> (i32, i32) {
    %c0_i32 = arith.constant 0 : i32
    %c0_i32_0 = arith.constant 0 : i32
    %c0_i32_1 = arith.constant 0 : i32
    return %c0_i32, %c0_i32_0 : i32, i32
  }
  func.func @transform_4(%arg0: i32) -> (i32, i32) {
    %c0_i32 = arith.constant 0 : i32
    %c0_i32_0 = arith.constant 0 : i32
    %c0_i32_1 = arith.constant 0 : i32
    return %c0_i32, %c0_i32_0 : i32, i32
  }
  func.func @transform_5(%arg0: i32) -> (i32, i32) {
    %c0_i32 = arith.constant 0 : i32
    %c0_i32_0 = arith.constant 0 : i32
    %c0_i32_1 = arith.constant 0 : i32
    return %c0_i32, %c0_i32_0 : i32, i32
  }
  func.func @transform_6(%arg0: i32) -> (i32, i32) {
    %c0_i32 = arith.constant 0 : i32
    %c0_i32_0 = arith.constant 0 : i32
    %c0_i32_1 = arith.constant 0 : i32
    return %c0_i32, %c0_i32_0 : i32, i32
  }
  func.func @transform_7(%arg0: i32) -> (i32, i32) {
    %c0_i32 = arith.constant 0 : i32
    %c0_i32_0 = arith.constant 0 : i32
    return %arg0, %c0_i32 : i32, i32
  }
}

</mosaic_0001>

<llo_original>
// kernel: earthquake_predictor.1
$region0: #{earthquake_predictor.1}
  #allocation0 [shape = 'u32[]', space=smem, size = 0x4, offset = 0x4, fixed_abs, tag = 'smem constant byte address 0x4 - core index']
  #allocation1 [shape = 'u32[144,128]{1,0:T(1,128)}', space=vmem, size = 0x12000, scoped, tag = 'internal scratch']
  #allocation2 [shape = 'f32[1,1]{1,0:T(1,128)S(1)}', space=vmem, size = 0x200, scoped, tag = 'scoped memory for earthquake_predictor.1']
  %s0 = inlined_call_operand.vmem [shape: bf16[16,128], index: 0, kind: input, shape index: {}]
  %s1 = inlined_call_operand.vmem [shape: bf16[32,16], index: 1, kind: input, shape index: {}]
  %s2 = inlined_call_operand.vmem [shape: f32[32,1], index: 2, kind: input, shape index: {}]
  %s3 = inlined_call_operand.vmem [shape: bf16[16,32], index: 3, kind: input, shape index: {}]
  %s4 = inlined_call_operand.vmem [shape: f32[16,1], index: 4, kind: input, shape index: {}]
  %s5 = inlined_call_operand.vmem [shape: bf16[1,16], index: 5, kind: input, shape index: {}]
  %s6 = inlined_call_operand.<no memory space> [shape: f32[1,1], index: 6, kind: input, shape index: {}]
  %s7 = inlined_call_operand.vmem [shape: f32[1,128], index: 7, kind: output, shape index: {}]
  %s8 = sld [smem:[#allocation0]]
  $region38: #{earthquake_predictor.1} parent=0
    _
  %s10 = ssub.s32 1, %s8
  %s11 = scalar_select 0, %s10, %s8
  %v12 = vstv %s6
  %13 = vst [vmem:[#allocation2] sm:$0x1] %v12
  // Predicated region
  $region2: #{earthquake_predictor.1} parent=0 // pred_check
    _
  $region3: #{earthquake_predictor.1} parent=0 // pred_check_branch
    %15 = sbr.rel (0) target = $region5
  $region4: #{earthquake_predictor.1} parent=0 // pred_region
    _
  $region5: #{earthquake_predictor.1} parent=0 // pred_fallthru
    _
  // Predicated region
  $region6: #{earthquake_predictor.1} parent=0 // pred_check
    _
  $region7: #{earthquake_predictor.1} parent=0 // pred_check_branch
    %17 = sbr.rel (0) target = $region9
  $region8: #{earthquake_predictor.1} parent=0 // pred_region
    _
  $region9: #{earthquake_predictor.1} parent=0 // pred_fallthru
    _
  // Predicated region
  $region10: #{earthquake_predictor.1} parent=0 // pred_check
    _
  $region11: #{earthquake_predictor.1} parent=0 // pred_check_branch
    %19 = sbr.rel (0) target = $region13
  $region12: #{earthquake_predictor.1} parent=0 // pred_region
    _
  $region13: #{earthquake_predictor.1} parent=0 // pred_fallthru
    _
  // Predicated region
  $region14: #{earthquake_predictor.1} parent=0 // pred_check
    _
  $region15: #{earthquake_predictor.1} parent=0 // pred_check_branch
    %21 = sbr.rel (0) target = $region17
  $region16: #{earthquake_predictor.1} parent=0 // pred_region
    _
  $region17: #{earthquake_predictor.1} parent=0 // pred_fallthru
    _
  // Predicated region
  $region18: #{earthquake_predictor.1} parent=0 // pred_check
    _
  $region19: #{earthquake_predictor.1} parent=0 // pred_check_branch
    %23 = sbr.rel (0) target = $region21
  $region20: #{earthquake_predictor.1} parent=0 // pred_region
    _
  $region21: #{earthquake_predictor.1} parent=0 // pred_fallthru
    _
  // Predicated region
  $region22: #{earthquake_predictor.1} parent=0 // pred_check
    _
  $region23: #{earthquake_predictor.1} parent=0 // pred_check_branch
    %25 = sbr.rel (0) target = $region25
  $region24: #{earthquake_predictor.1} parent=0 // pred_region
    _
  $region25: #{earthquake_predictor.1} parent=0 // pred_fallthru
    _
  // Predicated region
  $region26: #{earthquake_predictor.1} parent=0 // pred_check
    _
  $region27: #{earthquake_predictor.1} parent=0 // pred_check_branch
    %27 = sbr.rel (0) target = $region29
  $region28: #{earthquake_predictor.1} parent=0 // pred_region
    _
  $region29: #{earthquake_predictor.1} parent=0 // pred_fallthru
    _
  %v29 = vld [vmem:[%s0] sm:$0xf]
  %v30 = vld [vmem:[%s0 + $0x4] sm:$0xf]
  %v31 = vld [vmem:[%s1] sm:$0xf]
  %v32 = vld [vmem:[%s1 + $0x4] sm:$0xf]
  %v33 = vld [vmem:[%s1 + $0x8] sm:$0xf]
  %v34 = vld [vmem:[%s1 + $0xc] sm:$0xf]
  %v35 = vld [vmem:[%s2] sm:$0xff]
  %v36 = vld [vmem:[%s2 + $0x8] sm:$0xff]
  %v37 = vld [vmem:[%s2 + $0x10] sm:$0xff]
  %v38 = vld [vmem:[%s2 + $0x18] sm:$0xff]
  %40 = vset.pattern.permute.xlu0 0
  %41 = vperm.xlu0 %40, %v35
  %v42 = vpop.permute.xlu0 %41
  %45 = vset.pattern.permute.xlu0 0
  %46 = vperm.xlu0 %45, %v36
  %v47 = vpop.permute.xlu0 %46
  %50 = vset.pattern.permute.xlu0 0
  %51 = vperm.xlu0 %50, %v37
  %v52 = vpop.permute.xlu0 %51
  %55 = vset.pattern.permute.xlu0 0
  %56 = vperm.xlu0 %55, %v38
  %v57 = vpop.permute.xlu0 %56
  %v63 = vunpack.c.l.b16 %v31
  %v64 = vunpack.c.l.b16 %v32
  %v65 = vunpack.c.l.b16 %v33
  %v66 = vunpack.c.l.b16 %v34
  %v67 = vpack.c.b16 %v64, %v63
  %v68 = vpack.c.b16 %v66, %v65
  %v71 = vunpack.c.l.b16 %v29
  %v72 = vunpack.c.l.b16 %v30
  %v73 = vpack.c.b16 %v72, %v71
  %vm75 = vcmask 130048
  %v77 = vsel %vm75, %v67, 0
  %v80 = vsel %vm75, %v68, 0
  %82 = vmatprep.subr.bf16.mxu0 0
  %83 = vmatpush1.bf16.msra.mxu0 %v73
  %84 = vmatprep.subr.bf16.mxu0 0
  %85 = vmatpush1.bf16.msra.mxu0 0
  %86 = vmatprep.subr.bf16.mxu0 0
  %87 = vmatpush1.bf16.msra.mxu0 0
  %88 = vmatprep.subr.bf16.mxu0 0
  %89 = vmatpush1.bf16.msra.mxu0 0
  %90 = vmatprep.subr.bf16.mxu0 0
  %91 = vmatpush1.bf16.msra.mxu0 0
  %92 = vmatprep.subr.bf16.mxu0 0
  %93 = vmatpush1.bf16.msra.mxu0 0
  %94 = vmatprep.subr.bf16.mxu0 0
  %95 = vmatpush1.bf16.msra.mxu0 0
  %96 = vmatprep.subr.bf16.mxu0 0
  %97 = vmatpush1.bf16.msra.mxu0 0
  %98 = vmatprep.subr.bf16.mxu0 0
  %99 = vmatpush1.bf16.msra.mxu0 0
  %100 = vmatprep.subr.bf16.mxu0 0
  %101 = vmatpush1.bf16.msra.mxu0 0
  %102 = vmatprep.subr.bf16.mxu0 0
  %103 = vmatpush1.bf16.msra.mxu0 0
  %104 = vmatprep.subr.bf16.mxu0 0
  %105 = vmatpush1.bf16.msra.mxu0 0
  %106 = vmatprep.subr.bf16.mxu0 0
  %107 = vmatpush1.bf16.msra.mxu0 0
  %108 = vmatprep.subr.bf16.mxu0 0
  %109 = vmatpush1.bf16.msra.mxu0 0
  %110 = vmatprep.subr.bf16.mxu0 0
  %111 = vmatpush1.bf16.msra.mxu0 0
  %112 = vmatprep.subr.bf16.mxu0 0
  %113 = vmatpush1.bf16.msra.mxu0 0
  %114 = vmatprep.mubr.bf16.mxu0 0
  %115 = vmatmul.mubr.bf16.gmra.mrb[0].mxu0 %v77
  %v116 = vpop.f32.mrb[0].mxu0
  %v117 = vadd.f32 %v42, %v116
  %v118 = vpop.f32.mrb[0].mxu0
  %v119 = vpop.f32.mrb[0].mxu0
  %v120 = vadd.f32 %v47, %v119
  %v121 = vpop.f32.mrb[0].mxu0
  %122 = vmatprep.mubr.bf16.mxu0 0
  %123 = vmatmul.mubr.bf16.gmra.mrb[0].mxu0 %v80
  %v124 = vpop.f32.mrb[0].mxu0
  %v125 = vadd.f32 %v52, %v124
  %v126 = vpop.f32.mrb[0].mxu0
  %v127 = vpop.f32.mrb[0].mxu0
  %v128 = vadd.f32 %v57, %v127
  %v129 = vpop.f32.mrb[0].mxu0
  %130 = vdwg.mxu0
  %v131 = vmax.f32 %v117, 0.0
  %v132 = vmax.f32 %v120, 0.0
  %v133 = vmax.f32 %v125, 0.0
  %v134 = vmax.f32 %v128, 0.0
  %v135 = vpack.c.bf16 %v132, %v131
  %v136 = vpack.c.bf16 %v134, %v133
  %v137 = vld [vmem:[%s3] sm:$0xf]
  %v138 = vld [vmem:[%s3 + $0x4] sm:$0xf]
  %v139 = vld [vmem:[%s4] sm:$0xff]
  %v140 = vld [vmem:[%s4 + $0x8] sm:$0xff]
  %142 = vset.pattern.permute.xlu0 0
  %143 = vperm.xlu0 %142, %v139
  %v144 = vpop.permute.xlu0 %143
  %147 = vset.pattern.permute.xlu0 0
  %148 = vperm.xlu0 %147, %v140
  %v149 = vpop.permute.xlu0 %148
  %v153 = vunpack.c.l.b16 %v137
  %v154 = vunpack.c.l.b16 %v138
  %v155 = vpack.c.b16 %v154, %v153
  %vm156 = vcmask 261120
  %v158 = vsel %vm156, %v155, 0
  %160 = vmatprep.subr.bf16.mxu0 0
  %161 = vmatpush1.bf16.msra.mxu0 %v135
  %162 = vmatprep.subr.bf16.mxu0 0
  %163 = vmatpush1.bf16.msra.mxu0 %v136
  %164 = vmatprep.subr.bf16.mxu0 0
  %165 = vmatpush1.bf16.msra.mxu0 0
  %166 = vmatprep.subr.bf16.mxu0 0
  %167 = vmatpush1.bf16.msra.mxu0 0
  %168 = vmatprep.subr.bf16.mxu0 0
  %169 = vmatpush1.bf16.msra.mxu0 0
  %170 = vmatprep.subr.bf16.mxu0 0
  %171 = vmatpush1.bf16.msra.mxu0 0
  %172 = vmatprep.subr.bf16.mxu0 0
  %173 = vmatpush1.bf16.msra.mxu0 0
  %174 = vmatprep.subr.bf16.mxu0 0
  %175 = vmatpush1.bf16.msra.mxu0 0
  %176 = vmatprep.subr.bf16.mxu0 0
  %177 = vmatpush1.bf16.msra.mxu0 0
  %178 = vmatprep.subr.bf16.mxu0 0
  %179 = vmatpush1.bf16.msra.mxu0 0
  %180 = vmatprep.subr.bf16.mxu0 0
  %181 = vmatpush1.bf16.msra.mxu0 0
  %182 = vmatprep.subr.bf16.mxu0 0
  %183 = vmatpush1.bf16.msra.mxu0 0
  %184 = vmatprep.subr.bf16.mxu0 0
  %185 = vmatpush1.bf16.msra.mxu0 0
  %186 = vmatprep.subr.bf16.mxu0 0
  %187 = vmatpush1.bf16.msra.mxu0 0
  %188 = vmatprep.subr.bf16.mxu0 0
  %189 = vmatpush1.bf16.msra.mxu0 0
  %190 = vmatprep.subr.bf16.mxu0 0
  %191 = vmatpush1.bf16.msra.mxu0 0
  %192 = vmatprep.mubr.bf16.mxu0 0
  %193 = vmatmul.mubr.bf16.gmra.mrb[0].mxu0 %v158
  %v194 = vpop.f32.mrb[0].mxu0
  %v195 = vadd.f32 %v144, %v194
  %v196 = vpop.f32.mrb[0].mxu0
  %v197 = vpop.f32.mrb[0].mxu0
  %v198 = vadd.f32 %v149, %v197
  %v199 = vpop.f32.mrb[0].mxu0
  %200 = vdwg.mxu0
  %v201 = vmax.f32 %v195, 0.0
  %v202 = vmax.f32 %v198, 0.0
  %v203 = vpack.c.bf16 %v202, %v201
  %v204 = vld [vmem:[%s5] sm:$0x1]
  %v205 = vld [vmem:[#allocation2] sm:$0x1]
  %207 = vset.pattern.permute.xlu0 0
  %208 = vperm.xlu0 %207, %v205
  %v209 = vpop.permute.xlu0 %208
  %v211 = vlaneseq
  %v212 = vshrl.u32 %v211, 7
  %v213 = vsub.s32 0, %v212
  %v214 = vrot.slane %v209, %v213
  %v216 = vsel %vm75, %v204, 0
  %218 = vmatprep.subr.bf16.mxu0 0
  %219 = vmatpush1.bf16.msra.mxu0 %v203
  %220 = vmatprep.subr.bf16.mxu0 0
  %221 = vmatpush1.bf16.msra.mxu0 0
  %222 = vmatprep.subr.bf16.mxu0 0
  %223 = vmatpush1.bf16.msra.mxu0 0
  %224 = vmatprep.subr.bf16.mxu0 0
  %225 = vmatpush1.bf16.msra.mxu0 0
  %226 = vmatprep.subr.bf16.mxu0 0
  %227 = vmatpush1.bf16.msra.mxu0 0
  %228 = vmatprep.subr.bf16.mxu0 0
  %229 = vmatpush1.bf16.msra.mxu0 0
  %230 = vmatprep.subr.bf16.mxu0 0
  %231 = vmatpush1.bf16.msra.mxu0 0
  %232 = vmatprep.subr.bf16.mxu0 0
  %233 = vmatpush1.bf16.msra.mxu0 0
  %234 = vmatprep.subr.bf16.mxu0 0
  %235 = vmatpush1.bf16.msra.mxu0 0
  %236 = vmatprep.subr.bf16.mxu0 0
  %237 = vmatpush1.bf16.msra.mxu0 0
  %238 = vmatprep.subr.bf16.mxu0 0
  %239 = vmatpush1.bf16.msra.mxu0 0
  %240 = vmatprep.subr.bf16.mxu0 0
  %241 = vmatpush1.bf16.msra.mxu0 0
  %242 = vmatprep.subr.bf16.mxu0 0
  %243 = vmatpush1.bf16.msra.mxu0 0
  %244 = vmatprep.subr.bf16.mxu0 0
  %245 = vmatpush1.bf16.msra.mxu0 0
  %246 = vmatprep.subr.bf16.mxu0 0
  %247 = vmatpush1.bf16.msra.mxu0 0
  %248 = vmatprep.subr.bf16.mxu0 0
  %249 = vmatpush1.bf16.msra.mxu0 0
  %250 = vmatprep.mubr.bf16.mxu0 0
  %251 = vmatmul.mubr.bf16.gmra.mrb[0].mxu0 %v216
  %v252 = vpop.f32.mrb[0].mxu0
  %v253 = vadd.f32 %v214, %v252
  %v254 = vpop.f32.mrb[0].mxu0
  %v255 = vpop.f32.mrb[0].mxu0
  %v256 = vpop.f32.mrb[0].mxu0
  %257 = vdwg.mxu0
  %v258 = vxor.u32 %v253, 2147483648
  %v259 = vmul.f32 %v258, 1.442695
  %v260 = vpow.pop %v259
  %v261 = vadd.f32 %v260, 1.0
  %v262 = vrcp.pop %v261
  %v263 = vmul.f32 1.0, %v262
  %264 = vst [vmem:[%s7] sm:$0x1] %v263
  // Predicated region
  $region30: #{earthquake_predictor.1} parent=0 // pred_check
    _
  $region31: #{earthquake_predictor.1} parent=0 // pred_check_branch
    %266 = sbr.rel (0) target = $region33
  $region32: #{earthquake_predictor.1} parent=0 // pred_region
    _
  $region33: #{earthquake_predictor.1} parent=0 // pred_fallthru
    _
  // Predicated region
  $region34: #{earthquake_predictor.1} parent=0 // pred_check
    _
  $region35: #{earthquake_predictor.1} parent=0 // pred_check_branch
    %268 = sbr.rel (0) target = $region37
  $region36: #{earthquake_predictor.1} parent=0 // pred_region
    _
  $region37: #{earthquake_predictor.1} parent=0 // pred_fallthru
    _

</llo_original>
